<compile_context>
chip_gen: v5e
topology: v5e:2x2
jax: 0.10.0
libtpu: 0.0.40
codegen_flags: <defaults>
</compile_context>

<pallas_src>
import functools

import jax
import jax.numpy as jnp
from jax.experimental import pallas as pl
from jax.experimental.pallas import tpu as pltpu


def _cdiv(a, b):
    return -(-a // b)


def _round_up(a, b):
    return _cdiv(a, b) * b


def _self_output_kernel(h_ref, x_ref, w_ref, p_ref, o_ref, *, eps):
    # Dense on the MXU: native-dtype operands, f32 accumulation.
    y = jnp.dot(h_ref[...], w_ref[...], preferred_element_type=jnp.float32)

    # Packed params: row 0 = bias, row 1 = gamma, row 2 = beta.
    bias = p_ref[0:1, :].astype(jnp.float32)
    gamma = p_ref[1:2, :].astype(jnp.float32)
    beta = p_ref[2:3, :].astype(jnp.float32)

    # Dropout: module evaluated in inference mode -> identity.
    # TODO(synk): training-mode dropout (pltpu.prng_seed + stateful_bernoulli)
    # intentionally omitted to match eval semantics.
    y = y + bias + x_ref[...].astype(jnp.float32)          # bias + residual add

    # LayerNorm over the hidden axis: two-pass (PyTorch-matching numerics).
    inv_h = 1.0 / y.shape[-1]
    mean = jnp.sum(y, axis=-1, keepdims=True) * inv_h       # XLU reduce
    yc = y - mean
    var = jnp.sum(yc * yc, axis=-1, keepdims=True) * inv_h  # XLU reduce
    o_ref[...] = (gamma * (yc * jax.lax.rsqrt(var + eps)) + beta).astype(o_ref.dtype)


def _choose_block_rows(M, H, in_itemsize, out_itemsize, max_block_rows=512):
    """Dtype/H-aware row tile: fit a 48 MiB VMEM budget (v7x headroom) and
    guarantee >=2 grid steps whenever M allows (v7x 2-TC sharding)."""
    vmem_budget = 48 * 1024 * 1024
    resident = H * H * in_itemsize + 8 * H * in_itemsize    # weight + packed params
    avail = max(vmem_budget - resident, 2 * 1024 * 1024)
    # double-buffered h/x tiles + double-buffered out tile + ~3 live f32 temps.
    per_row = 2 * 2 * H * in_itemsize + 2 * H * out_itemsize + 3 * H * 4
    tm = max(8, min(max_block_rows, int(avail // per_row)))
    tm = (tm // 8) * 8
    if tm >= 256:
        tm = (tm // 256) * 256             # keep large tiles MXU/lane aligned
    if M >= 16:                            # >= 2 grid steps when possible
        tm = min(tm, _round_up(_cdiv(M, 2), 8))
    return max(8, min(tm, _round_up(M, 8)))


def _build_call(M, H, tm, in_dtype, out_dtype, eps, *, buffered_resident):
    grid = (_cdiv(M, tm),)
    resident_kwargs = {}
    weight_bufs = 2
    if buffered_resident:
        # Grid-invariant blocks: single buffer (halves resident VMEM footprint).
        resident_kwargs = dict(pipeline_mode=pl.Buffered(1))
        weight_bufs = 1

    in_itemsize = jnp.dtype(in_dtype).itemsize
    out_itemsize = jnp.dtype(out_dtype).itemsize

    # Derive the scoped-VMEM limit from actual tile footprints (+ headroom)
    # rather than requesting all of v7x's 64 MiB physical VMEM.
    resident_bytes = weight_bufs * (H * H + 8 * H) * in_itemsize
    stream_bytes = 2 * 2 * tm * H * in_itemsize + 2 * tm * H * out_itemsize
    temps_bytes = 4 * tm * H * 4
    vmem_limit = int(min(max(resident_bytes + stream_bytes + temps_bytes + (8 << 20),
                             32 << 20), 112 << 20))

    cost = pl.CostEstimate(
        flops=2 * M * H * H + 10 * M * H,
        transcendentals=M,                               # one rsqrt per row
        bytes_accessed=(2 * M * H + H * H + 3 * H) * in_itemsize
                       + M * H * out_itemsize,
    )

    return pl.pallas_call(
        functools.partial(_self_output_kernel, eps=eps),
        out_shape=jax.ShapeDtypeStruct((M, H), out_dtype),
        grid_spec=pltpu.PrefetchScalarGridSpec(
            num_scalar_prefetch=0,
            grid=grid,
            in_specs=[
                pl.BlockSpec((tm, H), lambda i: (i, 0)),                     # hidden tile
                pl.BlockSpec((tm, H), lambda i: (i, 0)),                     # residual tile
                pl.BlockSpec((H, H), lambda i: (0, 0), **resident_kwargs),   # weight (resident)
                pl.BlockSpec((3, H), lambda i: (0, 0), **resident_kwargs),   # b/gamma/beta (resident)
            ],
            out_specs=pl.BlockSpec((tm, H), lambda i: (i, 0)),
        ),
        compiler_params=pltpu.CompilerParams(
            dimension_semantics=("parallel",),     # rows independent (LN per row)
            vmem_limit_bytes=vmem_limit,
        ),
        cost_estimate=cost,
    )


def self_output(hidden_states, input_tensor, w_t, b, gamma, beta,
                *, eps=1e-12, max_block_rows=512):
    """hidden_states, input_tensor: [B, S, H].
    w_t: [H_in, H_out] (PyTorch weight transposed once at parameter-load time).
    b, gamma, beta: [H]."""
    B, S, H = hidden_states.shape
    M = B * S
    h2 = hidden_states.reshape(M, H)
    x2 = input_tensor.reshape(M, H)
    # Pack bias/gamma/beta into one resident (3, H) block: one DMA, one ref.
    params = jnp.stack([b, gamma, beta], axis=0)

    # TODO(synk): for very large H (>= 2048 on v7x) a K-tiled variant with an
    # f32 VMEM accumulator would bound the weight footprint; the resident (H,H)
    # weight used here fits comfortably for BERT-style hidden sizes.

    in_itemsize = jnp.dtype(hidden_states.dtype).itemsize
    tm = _choose_block_rows(M, H, in_itemsize, in_itemsize, max_block_rows)

    try:
        call = _build_call(M, H, tm, hidden_states.dtype, hidden_states.dtype,
                           eps, buffered_resident=True)
        out = call(h2, x2, w_t, params)
    except Exception:
        # Fallback for jax builds without BlockSpec(pipeline_mode=...):
        # default double-buffered resident operands (correctness unchanged).
        call = _build_call(M, H, tm, hidden_states.dtype, hidden_states.dtype,
                           eps, buffered_resident=False)
        out = call(h2, x2, w_t, params)

    return out.reshape(B, S, H)


def _reference(hidden_states, input_tensor, w, b, gamma, beta, eps=1e-12):
    y = jnp.einsum("bsh,oh->bso", hidden_states, w) + b
    y = y + input_tensor
    u = jnp.mean(y, axis=-1, keepdims=True)
    s = jnp.mean((y - u) ** 2, axis=-1, keepdims=True)
    return gamma * ((y - u) / jnp.sqrt(s + eps)) + beta


if __name__ == "__main__":
    B, S, H = 2, 8, 32
    key = jax.random.PRNGKey(0)
    k1, k2, k3, k4 = jax.random.split(key, 4)

    hidden_states = jax.random.normal(k1, (B, S, H), dtype=jnp.float32)
    input_tensor = jax.random.normal(k2, (B, S, H), dtype=jnp.float32)

    # Deterministic parameter init (nn.Linear-like uniform, LayerNorm ones/zeros)
    bound = 1.0 / (H ** 0.5)
    w = jax.random.uniform(k3, (H, H), minval=-bound, maxval=bound,
                           dtype=jnp.float32)          # PyTorch layout [out, in]
    b = jax.random.uniform(k4, (H,), minval=-bound, maxval=bound,
                           dtype=jnp.float32)
    gamma = jnp.ones((H,), dtype=jnp.float32)
    beta = jnp.zeros((H,), dtype=jnp.float32)

    # Hoisted transpose: done once at parameter-load time, not per call.
    w_t = jnp.asarray(w.T)                             # [H_in, H_out]

    out = self_output(hidden_states, input_tensor, w_t, b, gamma, beta)
    out = jax.block_until_ready(out)

    ref = _reference(hidden_states, input_tensor, w, b, gamma, beta)
    assert out.shape == (B, S, H)
    assert jnp.allclose(out, ref, atol=1e-5, rtol=1e-5), "mismatch vs reference"

    print("KERNEL_OK")
</pallas_src>

<mosaic_0001>
module attributes {stable_mosaic.version = 11 : i64} {
  func.func @_self_output_kernel(%arg0: i32, %arg1: memref<8x32xf32, #tpu.memory_space<vmem>>, %arg2: memref<8x32xf32, #tpu.memory_space<vmem>>, %arg3: memref<32x32xf32, #tpu.memory_space<vmem>>, %arg4: memref<3x32xf32, #tpu.memory_space<vmem>>, %arg5: memref<8x32xf32, #tpu.memory_space<vmem>>) attributes {dimension_semantics = [#tpu.dimension_semantics<parallel>], iteration_bounds = array<i64: 2>, scalar_prefetch = 0 : i64, scratch_operands = 0 : i64, tpu.core_type = #tpu.core_type<tc>, window_params = [{transform_indices = @transform_0, window_bounds = array<i64: 8, 32>}, {transform_indices = @transform_1, window_bounds = array<i64: 8, 32>}, {pipeline_mode = #tpu.pipeline_mode<synchronous>, transform_indices = @transform_2, window_bounds = array<i64: 32, 32>}, {pipeline_mode = #tpu.pipeline_mode<synchronous>, transform_indices = @transform_3, window_bounds = array<i64: 3, 32>}, {transform_indices = @transform_4, window_bounds = array<i64: 8, 32>}]} {
    %c0 = arith.constant 0 : index
    %c0_0 = arith.constant 0 : index
    %0 = vector.load %arg1[%c0, %c0_0] : memref<8x32xf32, #tpu.memory_space<vmem>>, vector<8x32xf32>
    %c0_1 = arith.constant 0 : index
    %c0_2 = arith.constant 0 : index
    %1 = vector.load %arg3[%c0_1, %c0_2] : memref<32x32xf32, #tpu.memory_space<vmem>>, vector<32x32xf32>
    %cst = arith.constant dense<0.000000e+00> : vector<8x32xf32>
    %2 = tpu.matmul %0, %1, %cst {dimension_numbers = #tpu.dot_dimension_numbers<[1], [0], [0], [1], [0, 0, 1, 1], [], []>} : vector<8x32xf32>, vector<32x32xf32>, vector<8x32xf32> -> vector<8x32xf32>
    %c0_3 = arith.constant 0 : index
    %c0_4 = arith.constant 0 : index
    %3 = vector.load %arg4[%c0_3, %c0_4] : memref<3x32xf32, #tpu.memory_space<vmem>>, vector<1x32xf32>
    %c1 = arith.constant 1 : index
    %c0_5 = arith.constant 0 : index
    %4 = vector.load %arg4[%c1, %c0_5] : memref<3x32xf32, #tpu.memory_space<vmem>>, vector<1x32xf32>
    %c2 = arith.constant 2 : index
    %c0_6 = arith.constant 0 : index
    %5 = vector.load %arg4[%c2, %c0_6] : memref<3x32xf32, #tpu.memory_space<vmem>>, vector<1x32xf32>
    %6 = vector.broadcast %3 : vector<1x32xf32> to vector<8x32xf32>
    %7 = arith.addf %2, %6 : vector<8x32xf32>
    %c0_7 = arith.constant 0 : index
    %c0_8 = arith.constant 0 : index
    %8 = vector.load %arg2[%c0_7, %c0_8] : memref<8x32xf32, #tpu.memory_space<vmem>>, vector<8x32xf32>
    %9 = arith.addf %7, %8 : vector<8x32xf32>
    %cst_9 = arith.constant dense<0.000000e+00> : vector<8xf32>
    %10 = vector.multi_reduction <add>, %9, %cst_9 [1] : vector<8x32xf32> to vector<8xf32>
    %11 = vector.shape_cast %10 : vector<8xf32> to vector<8x1xf32>
    %cst_10 = arith.constant 3.125000e-02 : f32
    %12 = vector.broadcast %cst_10 : f32 to vector<8x1xf32>
    %13 = arith.mulf %11, %12 : vector<8x1xf32>
    %14 = vector.broadcast %13 : vector<8x1xf32> to vector<8x32xf32>
    %15 = arith.subf %9, %14 : vector<8x32xf32>
    %16 = arith.mulf %15, %15 : vector<8x32xf32>
    %cst_11 = arith.constant dense<0.000000e+00> : vector<8xf32>
    %17 = vector.multi_reduction <add>, %16, %cst_11 [1] : vector<8x32xf32> to vector<8xf32>
    %18 = vector.shape_cast %17 : vector<8xf32> to vector<8x1xf32>
    %cst_12 = arith.constant 3.125000e-02 : f32
    %19 = vector.broadcast %cst_12 : f32 to vector<8x1xf32>
    %20 = arith.mulf %18, %19 : vector<8x1xf32>
    %cst_13 = arith.constant 9.99999996E-13 : f32
    %21 = vector.broadcast %cst_13 : f32 to vector<8x1xf32>
    %22 = arith.addf %20, %21 : vector<8x1xf32>
    %23 = math.rsqrt %22 : vector<8x1xf32>
    %24 = vector.broadcast %23 : vector<8x1xf32> to vector<8x32xf32>
    %25 = arith.mulf %15, %24 : vector<8x32xf32>
    %26 = vector.broadcast %4 : vector<1x32xf32> to vector<8x32xf32>
    %27 = arith.mulf %26, %25 : vector<8x32xf32>
    %28 = vector.broadcast %5 : vector<1x32xf32> to vector<8x32xf32>
    %29 = arith.addf %27, %28 : vector<8x32xf32>
    %c0_14 = arith.constant 0 : index
    %c0_15 = arith.constant 0 : index
    %30 = vector.load %arg5[%c0_14, %c0_15] : memref<8x32xf32, #tpu.memory_space<vmem>>, vector<8x32xf32>
    tpu.vector_store %arg5[%c0_14, %c0_15], %29 {strides = array<i32>} : memref<8x32xf32, #tpu.memory_space<vmem>>, vector<8x32xf32>,
    return
  }
  func.func @transform_0(%arg0: i32) -> (i32, i32) {
    %c0_i32 = arith.constant 0 : i32
    %c0_i32_0 = arith.constant 0 : i32
    return %arg0, %c0_i32 : i32, i32
  }
  func.func @transform_1(%arg0: i32) -> (i32, i32) {
    %c0_i32 = arith.constant 0 : i32
    %c0_i32_0 = arith.constant 0 : i32
    return %arg0, %c0_i32 : i32, i32
  }
  func.func @transform_2(%arg0: i32) -> (i32, i32) {
    %c0_i32 = arith.constant 0 : i32
    %c0_i32_0 = arith.constant 0 : i32
    %c0_i32_1 = arith.constant 0 : i32
    return %c0_i32, %c0_i32_0 : i32, i32
  }
  func.func @transform_3(%arg0: i32) -> (i32, i32) {
    %c0_i32 = arith.constant 0 : i32
    %c0_i32_0 = arith.constant 0 : i32
    %c0_i32_1 = arith.constant 0 : i32
    return %c0_i32, %c0_i32_0 : i32, i32
  }
  func.func @transform_4(%arg0: i32) -> (i32, i32) {
    %c0_i32 = arith.constant 0 : i32
    %c0_i32_0 = arith.constant 0 : i32
    return %arg0, %c0_i32 : i32, i32
  }
}

module attributes {stable_mosaic.version = 11 : i64} {
  func.func @_self_output_kernel(%arg0: i32, %arg1: memref<8x32xf32, #tpu.memory_space<vmem>>, %arg2: memref<8x32xf32, #tpu.memory_space<vmem>>, %arg3: memref<32x32xf32, #tpu.memory_space<vmem>>, %arg4: memref<3x32xf32, #tpu.memory_space<vmem>>, %arg5: memref<8x32xf32, #tpu.memory_space<vmem>>) attributes {dimension_semantics = [#tpu.dimension_semantics<parallel>], iteration_bounds = array<i64: 2>, scalar_prefetch = 0 : i64, scratch_operands = 0 : i64, tpu.core_type = #tpu.core_type<tc>, window_params = [{transform_indices = @transform_0, window_bounds = array<i64: 8, 32>}, {transform_indices = @transform_1, window_bounds = array<i64: 8, 32>}, {pipeline_mode = #tpu.pipeline_mode<synchronous>, transform_indices = @transform_2, window_bounds = array<i64: 32, 32>}, {pipeline_mode = #tpu.pipeline_mode<synchronous>, transform_indices = @transform_3, window_bounds = array<i64: 3, 32>}, {transform_indices = @transform_4, window_bounds = array<i64: 8, 32>}]} {
    %c0 = arith.constant 0 : index
    %c0_0 = arith.constant 0 : index
    %0 = vector.load %arg1[%c0, %c0_0] : memref<8x32xf32, #tpu.memory_space<vmem>>, vector<8x32xf32>
    %c0_1 = arith.constant 0 : index
    %c0_2 = arith.constant 0 : index
    %1 = vector.load %arg3[%c0_1, %c0_2] : memref<32x32xf32, #tpu.memory_space<vmem>>, vector<32x32xf32>
    %cst = arith.constant dense<0.000000e+00> : vector<8x32xf32>
    %2 = tpu.matmul %0, %1, %cst {dimension_numbers = #tpu.dot_dimension_numbers<[1], [0], [0], [1], [0, 0, 1, 1], [], []>} : vector<8x32xf32>, vector<32x32xf32>, vector<8x32xf32> -> vector<8x32xf32>
    %c0_3 = arith.constant 0 : index
    %c0_4 = arith.constant 0 : index
    %3 = vector.load %arg4[%c0_3, %c0_4] : memref<3x32xf32, #tpu.memory_space<vmem>>, vector<1x32xf32>
    %c1 = arith.constant 1 : index
    %c0_5 = arith.constant 0 : index
    %4 = vector.load %arg4[%c1, %c0_5] : memref<3x32xf32, #tpu.memory_space<vmem>>, vector<1x32xf32>
    %c2 = arith.constant 2 : index
    %c0_6 = arith.constant 0 : index
    %5 = vector.load %arg4[%c2, %c0_6] : memref<3x32xf32, #tpu.memory_space<vmem>>, vector<1x32xf32>
    %6 = vector.broadcast %3 : vector<1x32xf32> to vector<8x32xf32>
    %7 = arith.addf %2, %6 : vector<8x32xf32>
    %c0_7 = arith.constant 0 : index
    %c0_8 = arith.constant 0 : index
    %8 = vector.load %arg2[%c0_7, %c0_8] : memref<8x32xf32, #tpu.memory_space<vmem>>, vector<8x32xf32>
    %9 = arith.addf %7, %8 : vector<8x32xf32>
    %cst_9 = arith.constant dense<0.000000e+00> : vector<8xf32>
    %10 = vector.multi_reduction <add>, %9, %cst_9 [1] : vector<8x32xf32> to vector<8xf32>
    %11 = vector.shape_cast %10 : vector<8xf32> to vector<8x1xf32>
    %cst_10 = arith.constant 3.125000e-02 : f32
    %12 = vector.broadcast %cst_10 : f32 to vector<8x1xf32>
    %13 = arith.mulf %11, %12 : vector<8x1xf32>
    %14 = vector.broadcast %13 : vector<8x1xf32> to vector<8x32xf32>
    %15 = arith.subf %9, %14 : vector<8x32xf32>
    %16 = arith.mulf %15, %15 : vector<8x32xf32>
    %cst_11 = arith.constant dense<0.000000e+00> : vector<8xf32>
    %17 = vector.multi_reduction <add>, %16, %cst_11 [1] : vector<8x32xf32> to vector<8xf32>
    %18 = vector.shape_cast %17 : vector<8xf32> to vector<8x1xf32>
    %cst_12 = arith.constant 3.125000e-02 : f32
    %19 = vector.broadcast %cst_12 : f32 to vector<8x1xf32>
    %20 = arith.mulf %18, %19 : vector<8x1xf32>
    %cst_13 = arith.constant 9.99999996E-13 : f32
    %21 = vector.broadcast %cst_13 : f32 to vector<8x1xf32>
    %22 = arith.addf %20, %21 : vector<8x1xf32>
    %23 = math.rsqrt %22 : vector<8x1xf32>
    %24 = vector.broadcast %23 : vector<8x1xf32> to vector<8x32xf32>
    %25 = arith.mulf %15, %24 : vector<8x32xf32>
    %26 = vector.broadcast %4 : vector<1x32xf32> to vector<8x32xf32>
    %27 = arith.mulf %26, %25 : vector<8x32xf32>
    %28 = vector.broadcast %5 : vector<1x32xf32> to vector<8x32xf32>
    %29 = arith.addf %27, %28 : vector<8x32xf32>
    %c0_14 = arith.constant 0 : index
    %c0_15 = arith.constant 0 : index
    %30 = vector.load %arg5[%c0_14, %c0_15] : memref<8x32xf32, #tpu.memory_space<vmem>>, vector<8x32xf32>
    tpu.vector_store %arg5[%c0_14, %c0_15], %29 {strides = array<i32>} : memref<8x32xf32, #tpu.memory_space<vmem>>, vector<8x32xf32>,
    return
  }
  func.func @transform_0(%arg0: i32) -> (i32, i32) {
    %c0_i32 = arith.constant 0 : i32
    %c0_i32_0 = arith.constant 0 : i32
    return %arg0, %c0_i32 : i32, i32
  }
  func.func @transform_1(%arg0: i32) -> (i32, i32) {
    %c0_i32 = arith.constant 0 : i32
    %c0_i32_0 = arith.constant 0 : i32
    return %arg0, %c0_i32 : i32, i32
  }
  func.func @transform_2(%arg0: i32) -> (i32, i32) {
    %c0_i32 = arith.constant 0 : i32
    %c0_i32_0 = arith.constant 0 : i32
    %c0_i32_1 = arith.constant 0 : i32
    return %c0_i32, %c0_i32_0 : i32, i32
  }
  func.func @transform_3(%arg0: i32) -> (i32, i32) {
    %c0_i32 = arith.constant 0 : i32
    %c0_i32_0 = arith.constant 0 : i32
    %c0_i32_1 = arith.constant 0 : i32
    return %c0_i32, %c0_i32_0 : i32, i32
  }
  func.func @transform_4(%arg0: i32) -> (i32, i32) {
    %c0_i32 = arith.constant 0 : i32
    %c0_i32_0 = arith.constant 0 : i32
    return %arg0, %c0_i32 : i32, i32
  }
}

</mosaic_0001>

<llo_original>
// kernel: tpu_custom_call.1
$region0: #{tpu_custom_call.1}
  #allocation0 [shape = 'u32[]', space=smem, size = 0x4, offset = 0x4, fixed_abs, tag = 'smem constant byte address 0x4 - core index']
  #allocation1 [shape = 'u32[72,128]{1,0:T(1,128)}', space=vmem, size = 0x9000, scoped, tag = 'internal scratch']
  %s0 = inlined_call_operand.hbm [shape: f32[16,32], index: 0, kind: input, shape index: {}]
  %s1 = inlined_call_operand.hbm [shape: f32[16,32], index: 1, kind: input, shape index: {}]
  %s2 = inlined_call_operand.hbm [shape: f32[32,32], index: 2, kind: input, shape index: {}]
  %s3 = inlined_call_operand.hbm [shape: f32[3,32], index: 3, kind: input, shape index: {}]
  %s4 = inlined_call_operand.hbm [shape: f32[16,32], index: 4, kind: output, shape index: {}]
  %s5 = sld [smem:[#allocation0]]
  $region65: #{tpu_custom_call.1} parent=0
    _
  %s7 = ssub.s32 1, %s5
  %s8 = scalar_select 0, %s7, %s5
  $region1: #{tpu_custom_call.1} parent=0
    #allocation2 [shape = 'u8[8192]{0}', space=vmem, size = 0x2000, scoped, tag = 'input window, operand 0']
    #allocation3 [shape = 's32[2]{0}', space=sflag, size = 0x8, scoped, tag = 'scoped memory for tpu_custom_call.1']
    #allocation4 [shape = 's32[2]{0}', space=sflag, size = 0x8, scoped, tag = 'scoped memory for tpu_custom_call.1']
    #allocation5 [shape = 'u8[8192]{0}', space=vmem, size = 0x2000, scoped, tag = 'input window, operand 1']
    #allocation6 [shape = 's32[2]{0}', space=sflag, size = 0x8, scoped, tag = 'scoped memory for tpu_custom_call.1']
    #allocation7 [shape = 'u8[16384]{0}', space=vmem, size = 0x4000, scoped, tag = 'input window, operand 2, single buffered']
    #allocation8 [shape = 'u8[2048]{0}', space=vmem, size = 0x800, scoped, tag = 'input window, operand 3, single buffered']
    #allocation9 [shape = 's32[1]{0}', space=sflag, size = 0x4, scoped, tag = 'scoped memory for tpu_custom_call.1']
    #allocation10 [shape = 'u8[8192]{0}', space=vmem, size = 0x2000, scoped, tag = 'output window, operand 0']
    %9 = vsyncpa [#allocation3], 0
    %s10 = scalar_lea.sflag [#allocation3], 1
    %11 = vsyncpa %s10, 0
    %12 = vsyncpa [#allocation6], 0
    %s13 = scalar_lea.sflag [#allocation6], 1
    %14 = vsyncpa %s13, 0
    %15 = vsyncpa [#allocation9], 0
    %16 = vsyncpa [#allocation4], 0
    %s17 = scalar_lea.sflag [#allocation4], 1
    %18 = vsyncpa %s17, 0
    loop: start=0, step=1, limit=4
    $region2: #{tpu_custom_call.1} parent=1 // loop_pre_header
      _
    $region3: #{tpu_custom_call.1} parent=1 // loop_header
      %s20 = sphi 0, %s24
      %p21 = scmp.ge.s32.totalorder %s20, 4
      %s30 = sphi 0, %s32
      %s33 = sphi 0, %s30
      %s34 = sphi 0, %s33
      %s50 = sphi 0, %s34
      %s56 = sphi 0, %s58
      %s59 = sphi 0, %s56
      %s60 = sphi 0, %s59
      %s76 = sphi 0, %s60
      %s80 = sphi 0, %s80
      %s82 = sphi 0, %s80
      %s83 = sphi 0, %s82
      %s97 = sphi 0, %s83
      %s101 = sphi 0, %s101
      %s103 = sphi 0, %s101
      %s104 = sphi 0, %s103
      %s118 = sphi 0, %s104
      %s124 = sphi 0, %s126
      %s127 = sphi 0, %s124
      %s128 = sphi 0, %s127
      %s144 = sphi 0, %s128
    $region4: #{tpu_custom_call.1} parent=1 // loop_header_branch
      %23 = sbr.rel (%p21) target = $region8
    $region5: #{tpu_custom_call.1} parent=1 // loop_body
      %s25 = ssub.s32 %s20, 1
      %s26 = ssub.s32 %s20, 2
      %s27 = sadd.s32 %s20, 1
      %s28 = ssub.s32 %s20, %s27
      %p29 = scmp.eq.s32.totalorder %s28, 0
      %s31 = sadd.s32 %s30, 1
      %s32 = scalar_select %p29, %s30, %s31
      %p35 = pneg %p29
      %p36 = scmp.eq.s32.totalorder %s20, 1
      %p37 = por %p35, %p36
      %p38 = scmp.ne.s32.totalorder %s30, %s33
      %p39 = scmp.eq.s32.totalorder %s20, 0
      %p40 = por %p38, %p39
      %p41 = scmp.ne.s32.totalorder %s30, %s33
      %p42 = scmp.eq.s32.totalorder %s25, 1
      %p43 = por %p41, %p42
      %p44 = scmp.ne.s32.totalorder %s33, %s34
      %p45 = scmp.eq.s32.totalorder %s25, 0
      %p46 = por %p44, %p45
      %p47 = scmp.ne.s32.totalorder %s33, %s34
      %p48 = scmp.eq.s32.totalorder %s26, 1
      %p49 = por %p47, %p48
      %p51 = scmp.ne.s32.totalorder %s34, %s50
      %p52 = scmp.eq.s32.totalorder %s26, 0
      %p53 = por %p51, %p52
      %s54 = ssub.s32 %s20, %s27
      %p55 = scmp.eq.s32.totalorder %s54, 0
      %s57 = sadd.s32 %s56, 1
      %s58 = scalar_select %p55, %s56, %s57
      %p61 = pneg %p55
      %p62 = scmp.eq.s32.totalorder %s20, 1
      %p63 = por %p61, %p62
      %p64 = scmp.ne.s32.totalorder %s56, %s59
      %p65 = scmp.eq.s32.totalorder %s20, 0
      %p66 = por %p64, %p65
      %p67 = scmp.ne.s32.totalorder %s56, %s59
      %p68 = scmp.eq.s32.totalorder %s25, 1
      %p69 = por %p67, %p68
      %p70 = scmp.ne.s32.totalorder %s59, %s60
      %p71 = scmp.eq.s32.totalorder %s25, 0
      %p72 = por %p70, %p71
      %p73 = scmp.ne.s32.totalorder %s59, %s60
      %p74 = scmp.eq.s32.totalorder %s26, 1
      %p75 = por %p73, %p74
      %p77 = scmp.ne.s32.totalorder %s60, %s76
      %p78 = scmp.eq.s32.totalorder %s26, 0
      %p79 = por %p77, %p78
      %s81 = sadd.s32 %s80, 1
      %p84 = scmp.eq.s32.totalorder %s20, 1
      %p85 = scmp.ne.s32.totalorder %s80, %s82
      %p86 = scmp.eq.s32.totalorder %s20, 0
      %p87 = por %p85, %p86
      %p88 = scmp.ne.s32.totalorder %s80, %s82
      %p89 = scmp.eq.s32.totalorder %s25, 1
      %p90 = por %p88, %p89
      %p91 = scmp.ne.s32.totalorder %s82, %s83
      %p92 = scmp.eq.s32.totalorder %s25, 0
      %p93 = por %p91, %p92
      %p94 = scmp.ne.s32.totalorder %s82, %s83
      %p95 = scmp.eq.s32.totalorder %s26, 1
      %p96 = por %p94, %p95
      %p98 = scmp.ne.s32.totalorder %s83, %s97
      %p99 = scmp.eq.s32.totalorder %s26, 0
      %p100 = por %p98, %p99
      %s102 = sadd.s32 %s101, 1
      %p105 = scmp.eq.s32.totalorder %s20, 1
      %p106 = scmp.ne.s32.totalorder %s101, %s103
      %p107 = scmp.eq.s32.totalorder %s20, 0
      %p108 = por %p106, %p107
      %p109 = scmp.ne.s32.totalorder %s101, %s103
      %p110 = scmp.eq.s32.totalorder %s25, 1
      %p111 = por %p109, %p110
      %p112 = scmp.ne.s32.totalorder %s103, %s104
      %p113 = scmp.eq.s32.totalorder %s25, 0
      %p114 = por %p112, %p113
      %p115 = scmp.ne.s32.totalorder %s103, %s104
      %p116 = scmp.eq.s32.totalorder %s26, 1
      %p117 = por %p115, %p116
      %p119 = scmp.ne.s32.totalorder %s104, %s118
      %p120 = scmp.eq.s32.totalorder %s26, 0
      %p121 = por %p119, %p120
      %s122 = ssub.s32 %s20, %s27
      %p123 = scmp.eq.s32.totalorder %s122, 0
      %s125 = sadd.s32 %s124, 1
      %s126 = scalar_select %p123, %s124, %s125
      %p129 = pneg %p123
      %p130 = scmp.eq.s32.totalorder %s20, 1
      %p131 = por %p129, %p130
      %p132 = scmp.ne.s32.totalorder %s124, %s127
      %p133 = scmp.eq.s32.totalorder %s20, 0
      %p134 = por %p132, %p133
      %p135 = scmp.ne.s32.totalorder %s124, %s127
      %p136 = scmp.eq.s32.totalorder %s25, 1
      %p137 = por %p135, %p136
      %p138 = scmp.ne.s32.totalorder %s127, %s128
      %p139 = scmp.eq.s32.totalorder %s25, 0
      %p140 = por %p138, %p139
      %p141 = scmp.ne.s32.totalorder %s127, %s128
      %p142 = scmp.eq.s32.totalorder %s26, 1
      %p143 = por %p141, %p142
      %p145 = scmp.ne.s32.totalorder %s128, %s144
      %p146 = scmp.eq.s32.totalorder %s26, 0
      %p147 = por %p145, %p146
      %p148 = scmp.le.s32.totalorder 1, %s20
      %p149 = scmp.lt.s32.totalorder %s20, 3
      %p150 = pnand %p148, %p149
      %p151 = pneg %p150
      // Predicated region
      $region9: #{tpu_custom_call.1} parent=5 // pred_check
        _
      $region10: #{tpu_custom_call.1} parent=5 // pred_check_branch
        %153 = sbr.rel (%p150) target = $region12
      $region11: #{tpu_custom_call.1} parent=5 // pred_region
        %s154 = ssub.s32 %s20, 1
        // Predicated region
        $region13: #{tpu_custom_call.1} parent=11 // pred_check
          %p155 = pneg %p93
        $region14: #{tpu_custom_call.1} parent=11 // pred_check_branch
          %157 = sbr.rel (%p155) target = $region16
        $region15: #{tpu_custom_call.1} parent=11 // pred_region
          %159 = vsyncadd [#allocation6], 0
          %s160 = sshll.u32 %s2, 4
          %s161 = int_to_ptr.hbm [resolvable:$true] %s160
          %s162 = sshll.u32 [#allocation7], 4
          %s163 = int_to_ptr.vmem [resolvable:$true] %s162
          %168 = dma.hbm_to_vmem [thread:$0]  %s161, 512, %s163, [#allocation6], 128, 128, 8
        $region16: #{tpu_custom_call.1} parent=11 // pred_fallthru
          _
        // Predicated region
        $region17: #{tpu_custom_call.1} parent=11 // pred_check
          %p169 = pneg %p114
        $region18: #{tpu_custom_call.1} parent=11 // pred_check_branch
          %171 = sbr.rel (%p169) target = $region20
        $region19: #{tpu_custom_call.1} parent=11 // pred_region
          %173 = vsyncadd [#allocation9], 0
          %s175 = sshll.u32 %s3, 4
          %s176 = int_to_ptr.hbm [resolvable:$true] %s175
          %s177 = sshll.u32 [#allocation8], 4
          %s178 = int_to_ptr.vmem [resolvable:$true] %s177
          %180 = dma.hbm_to_vmem [thread:$0]  %s176, 64, %s178, [#allocation9]
        $region20: #{tpu_custom_call.1} parent=11 // pred_fallthru
          _
      $region12: #{tpu_custom_call.1} parent=5 // pred_fallthru
        _
      %p181 = scmp.lt.s32.totalorder %s20, 2
      // Predicated region
      $region21: #{tpu_custom_call.1} parent=5 // pred_check
        %p182 = pneg %p181
      $region22: #{tpu_custom_call.1} parent=5 // pred_check_branch
        %184 = sbr.rel (%p182) target = $region24
      $region23: #{tpu_custom_call.1} parent=5 // pred_region
        // Predicated region
        $region25: #{tpu_custom_call.1} parent=23 // pred_check
          %p185 = pneg %p40
        $region26: #{tpu_custom_call.1} parent=23 // pred_check_branch
          %187 = sbr.rel (%p185) target = $region28
        $region27: #{tpu_custom_call.1} parent=23 // pred_region
          %s188 = sand.u32 %s30, 1
          %s189 = scalar_lea.sflag [#allocation3], %s188
          %s190 = sand.u32 %s30, 1
          %s191 = smul.addr %s190, 8
          %s192 = scalar_lea.vmem [#allocation2], %s191
          %194 = vsyncadd %s189, 0
          %s195 = smul.addr %s20, 8
          %s196 = scalar_lea.hbm %s0, %s195
          %s198 = sshll.u32 %s196, 4
          %s199 = int_to_ptr.hbm [resolvable:$true] %s198
          %s200 = sshll.u32 %s192, 4
          %s201 = int_to_ptr.vmem [resolvable:$true] %s200
          %203 = dma.hbm_to_vmem [thread:$0]  %s199, 128, %s201, %s189
        $region28: #{tpu_custom_call.1} parent=23 // pred_fallthru
          _
        // Predicated region
        $region29: #{tpu_custom_call.1} parent=23 // pred_check
          %p204 = pneg %p66
        $region30: #{tpu_custom_call.1} parent=23 // pred_check_branch
          %206 = sbr.rel (%p204) target = $region32
        $region31: #{tpu_custom_call.1} parent=23 // pred_region
          %s207 = sand.u32 %s20, 1
          %s208 = scalar_lea.sflag [#allocation6], %s207
          %s209 = sand.u32 %s56, 1
          %s210 = smul.addr %s209, 8
          %s211 = scalar_lea.vmem [#allocation5], %s210
          %213 = vsyncadd %s208, 0
          %s214 = smul.addr %s20, 8
          %s215 = scalar_lea.hbm %s1, %s214
          %s217 = sshll.u32 %s215, 4
          %s218 = int_to_ptr.hbm [resolvable:$true] %s217
          %s219 = sshll.u32 %s211, 4
          %s220 = int_to_ptr.vmem [resolvable:$true] %s219
          %222 = dma.hbm_to_vmem [thread:$0]  %s218, 128, %s220, %s208
        $region32: #{tpu_custom_call.1} parent=23 // pred_fallthru
          _
      $region24: #{tpu_custom_call.1} parent=5 // pred_fallthru
        _
      %p223 = scmp.le.s32.totalorder 1, %s20
      %p224 = scmp.lt.s32.totalorder %s20, 3
      %p225 = pnand %p223, %p224
      %p226 = pneg %p225
      // Predicated region
      $region33: #{tpu_custom_call.1} parent=5 // pred_check
        _
      $region34: #{tpu_custom_call.1} parent=5 // pred_check_branch
        %228 = sbr.rel (%p225) target = $region36
      $region35: #{tpu_custom_call.1} parent=5 // pred_region
        %s229 = ssub.s32 %s20, 1
        %s230 = sand.u32 %s33, 1
        %s231 = scalar_lea.sflag [#allocation3], %s230
        %s232 = sand.u32 %s33, 1
        %s233 = smul.addr %s232, 8
        %s234 = scalar_lea.vmem [#allocation2], %s233
        // Predicated region
        $region37: #{tpu_custom_call.1} parent=35 // pred_check
          %p235 = pneg %p46
        $region38: #{tpu_custom_call.1} parent=35 // pred_check_branch
          %237 = sbr.rel (%p235) target = $region40
        $region39: #{tpu_custom_call.1} parent=35 // pred_region
          %239 = dma.done %s231, 128
        $region40: #{tpu_custom_call.1} parent=35 // pred_fallthru
          _
        %s240 = sand.u32 %s25, 1
        %s241 = scalar_lea.sflag [#allocation6], %s240
        %s242 = sand.u32 %s59, 1
        %s243 = smul.addr %s242, 8
        %s244 = scalar_lea.vmem [#allocation5], %s243
        // Predicated region
        $region41: #{tpu_custom_call.1} parent=35 // pred_check
          %p245 = pneg %p72
        $region42: #{tpu_custom_call.1} parent=35 // pred_check_branch
          %247 = sbr.rel (%p245) target = $region44
        $region43: #{tpu_custom_call.1} parent=35 // pred_region
          %249 = dma.done %s241, 128
        $region44: #{tpu_custom_call.1} parent=35 // pred_fallthru
          _
        // Predicated region
        $region45: #{tpu_custom_call.1} parent=35 // pred_check
          %p250 = pneg %p93
        $region46: #{tpu_custom_call.1} parent=35 // pred_check_branch
          %252 = sbr.rel (%p250) target = $region48
        $region47: #{tpu_custom_call.1} parent=35 // pred_region
          %254 = dma.done [#allocation6], 512
        $region48: #{tpu_custom_call.1} parent=35 // pred_fallthru
          _
        // Predicated region
        $region49: #{tpu_custom_call.1} parent=35 // pred_check
          %p255 = pneg %p114
        $region50: #{tpu_custom_call.1} parent=35 // pred_check_branch
          %257 = sbr.rel (%p255) target = $region52
        $region51: #{tpu_custom_call.1} parent=35 // pred_region
          %259 = dma.done [#allocation9], 64
        $region52: #{tpu_custom_call.1} parent=35 // pred_fallthru
          _
        %s260 = sand.u32 %s33, 1
        %s261 = scalar_lea.sflag [#allocation3], %s260
        %s262 = sand.u32 %s33, 1
        %s263 = smul.addr %s262, 8
        %s264 = scalar_lea.vmem [#allocation2], %s263
        %p265 = pneg %p46
        %p266 = pneg %p43
        %s267 = sand.u32 %s25, 1
        %s268 = scalar_lea.sflag [#allocation6], %s267
        %s269 = sand.u32 %s59, 1
        %s270 = smul.addr %s269, 8
        %s271 = scalar_lea.vmem [#allocation5], %s270
        %p272 = pneg %p72
        %p273 = pneg %p69
        %p274 = pneg %p93
        %p275 = pneg %p90
        %p276 = pneg %p114
        %p277 = pneg %p111
        %p278 = pneg %p140
        %p279 = pneg %p137
        %s280 = sand.u32 %s127, 1
        %s281 = scalar_lea.sflag [#allocation4], %s280
        %s282 = sand.u32 %s127, 1
        %s283 = smul.addr %s282, 8
        %s284 = scalar_lea.vmem [#allocation10], %s283
        %v285 = vld [vmem:[%s234] sm:$0xff]
        %v286 = vld [vmem:[#allocation7] sm:$0xff]
        %v287 = vld [vmem:[#allocation7 + $0x8] sm:$0xff]
        %v288 = vld [vmem:[#allocation7 + $0x10] sm:$0xff]
        %v289 = vld [vmem:[#allocation7 + $0x18] sm:$0xff]
        %v290 = vld [vmem:[#allocation8] sm:$0x1]
        %v291 = vld [vmem:[#allocation8 + $0x1] sm:$0x1]
        %v292 = vld [vmem:[#allocation8 + $0x2] sm:$0x1]
        %v293 = vperm.slane %v290, 0
        %vm294 = vcmask 261120
        %v296 = vsel %vm294, %v285, 0
        %298 = vmatpush.msra.mxu0 0.0
        %299 = vmatpush.msra.mxu0 0.0
        %300 = vmatpush.msra.mxu0 0.0
        %301 = vmatpush.msra.mxu0 0.0
        %302 = vmatpush.msra.mxu0 0.0
        %303 = vmatpush.msra.mxu0 0.0
        %304 = vmatpush.msra.mxu0 0.0
        %305 = vmatpush.msra.mxu0 0.0
        %306 = vmatpush.msra.mxu0 0.0
        %307 = vmatpush.msra.mxu0 0.0
        %308 = vmatpush.msra.mxu0 0.0
        %309 = vmatpush.msra.mxu0 0.0
        %310 = vmatpush.msra.mxu0 %v289
        %311 = vmatpush.msra.mxu0 %v288
        %312 = vmatpush.msra.mxu0 %v287
        %313 = vmatpush.msra.mxu0 %v286
        %314 = vmatmul.f32.gmra.mxu0 %v296
        %v315 = vpop.f32.mrf.mxu0
        %v316 = vadd.f32 %v293, %v315
        %317 = vdwg.mxu0
        %v318 = vld [vmem:[%s244] sm:$0xff]
        %v319 = vadd.f32 %v316, %v318
        %v320 = vsel %vm294, %v319, 0.0
        %321 = vadd.xlane.f32.xlu0 %v320
        %v322 = vpop.xlane.xlu0 %321
        %v323 = vmul.f32 %v322, 0.03125
        %v324 = vsub.f32 %v319, %v323
        %v325 = vmul.f32 %v324, %v324
        %v326 = vsel %vm294, %v325, 0.0
        %327 = vadd.xlane.f32.xlu0 %v326
        %v328 = vpop.xlane.xlu0 %327
        %v329 = vmul.f32 %v328, 0.03125
        %v330 = vadd.f32 %v329, 1e-12
        %v331 = vrsqrt.pop %v330
        %v332 = vmul.f32 %v331, %v330
        %v333 = vmul.f32 %v332, %v331
        %v334 = vmul.f32 0.5, %v333
        %v335 = vsub.f32 1.5, %v334
        %v336 = vmul.f32 %v331, %v335
        %vm337 = vweird.f32 %v330
        %vm338 = vweird.f32 %v331
        %vm339 = vmor %vm337, %vm338
        %v340 = vsel %vm339, %v331, %v336
        %v341 = vmul.f32 %v324, %v340
        %v342 = vperm.slane %v291, 0
        %v343 = vmul.f32 %v342, %v341
        %v344 = vperm.slane %v292, 0
        %v345 = vadd.f32 %v343, %v344
        %346 = vst.msk [vmem:[%s284] sm:$0xff] %vm294, %v345
        %s347 = sand.u32 %s127, 1
        %s348 = scalar_lea.sflag [#allocation4], %s347
        %s349 = sand.u32 %s127, 1
        %s350 = smul.addr %s349, 8
        %s351 = scalar_lea.vmem [#allocation10], %s350
        // Predicated region
        $region53: #{tpu_custom_call.1} parent=35 // pred_check
          %p352 = pneg %p137
        $region54: #{tpu_custom_call.1} parent=35 // pred_check_branch
          %354 = sbr.rel (%p352) target = $region56
        $region55: #{tpu_custom_call.1} parent=35 // pred_region
          %356 = vsyncadd %s348, 0
          %s357 = smul.addr %s25, 8
          %s358 = scalar_lea.hbm %s4, %s357
          %s360 = sshll.u32 %s351, 4
          %s361 = int_to_ptr.vmem [resolvable:$true] %s360
          %s362 = sshll.u32 %s358, 4
          %s363 = int_to_ptr.hbm [resolvable:$true] %s362
          %365 = dma.vmem_to_hbm [thread:$0]  %s361, 128, %s363, %s348
        $region56: #{tpu_custom_call.1} parent=35 // pred_fallthru
          _
      $region36: #{tpu_custom_call.1} parent=5 // pred_fallthru
        _
      %p366 = scmp.le.s32.totalorder 2, %s20
      // Predicated region
      $region57: #{tpu_custom_call.1} parent=5 // pred_check
        %p367 = pneg %p366
      $region58: #{tpu_custom_call.1} parent=5 // pred_check_branch
        %369 = sbr.rel (%p367) target = $region60
      $region59: #{tpu_custom_call.1} parent=5 // pred_region
        %s370 = ssub.s32 %s20, 2
        // Predicated region
        $region61: #{tpu_custom_call.1} parent=59 // pred_check
          %p371 = pneg %p143
        $region62: #{tpu_custom_call.1} parent=59 // pred_check_branch
          %373 = sbr.rel (%p371) target = $region64
        $region63: #{tpu_custom_call.1} parent=59 // pred_region
          %s374 = sand.u32 %s128, 1
          %s375 = scalar_lea.sflag [#allocation4], %s374
          %s376 = sand.u32 %s128, 1
          %s377 = smul.addr %s376, 8
          %s378 = scalar_lea.vmem [#allocation10], %s377
          %380 = dma.done %s375, 128
        $region64: #{tpu_custom_call.1} parent=59 // pred_fallthru
          _
      $region60: #{tpu_custom_call.1} parent=5 // pred_fallthru
        _
    $region6: #{tpu_custom_call.1} parent=1 // loop_footer
      %s24 = sadd.s32 1, %s20
    $region7: #{tpu_custom_call.1} parent=1 // loop_footer_branch
      %19 = sbr.rel target = $region3
    $region8: #{tpu_custom_call.1} parent=1 // loop_exit
      _
    %381 = vsyncpa [#allocation3], 1
    %s382 = scalar_lea.sflag [#allocation3], 1
    %383 = vsyncpa %s382, 1
    %384 = vsyncpa [#allocation6], 1
    %s385 = scalar_lea.sflag [#allocation6], 1
    %386 = vsyncpa %s385, 1
    %387 = vsyncpa [#allocation9], 1
    %388 = vsyncpa [#allocation4], 1
    %s389 = scalar_lea.sflag [#allocation4], 1
    %390 = vsyncpa %s389, 1

// kernel: tpu_custom_call.1
$region0: #{tpu_custom_call.1}
  #allocation0 [shape = 'u32[]', space=smem, size = 0x4, offset = 0x4, fixed_abs, tag = 'smem constant byte address 0x4 - core index']
  #allocation1 [shape = 'u32[72,128]{1,0:T(1,128)}', space=vmem, size = 0x9000, scoped, tag = 'internal scratch']
  %s0 = inlined_call_operand.hbm [shape: f32[16,32], index: 0, kind: input, shape index: {}]
  %s1 = inlined_call_operand.hbm [shape: f32[16,32], index: 1, kind: input, shape index: {}]
  %s2 = inlined_call_operand.hbm [shape: f32[32,32], index: 2, kind: input, shape index: {}]
  %s3 = inlined_call_operand.hbm [shape: f32[3,32], index: 3, kind: input, shape index: {}]
  %s4 = inlined_call_operand.hbm [shape: f32[16,32], index: 4, kind: output, shape index: {}]
  %s5 = sld [smem:[#allocation0]]
  $region65: #{tpu_custom_call.1} parent=0
    _
  %s7 = ssub.s32 1, %s5
  %s8 = scalar_select 0, %s7, %s5
  $region1: #{tpu_custom_call.1} parent=0
    #allocation2 [shape = 'u8[8192]{0}', space=vmem, size = 0x2000, scoped, tag = 'input window, operand 0']
    #allocation3 [shape = 's32[2]{0}', space=sflag, size = 0x8, scoped, tag = 'scoped memory for tpu_custom_call.1']
    #allocation4 [shape = 's32[2]{0}', space=sflag, size = 0x8, scoped, tag = 'scoped memory for tpu_custom_call.1']
    #allocation5 [shape = 'u8[8192]{0}', space=vmem, size = 0x2000, scoped, tag = 'input window, operand 1']
    #allocation6 [shape = 's32[2]{0}', space=sflag, size = 0x8, scoped, tag = 'scoped memory for tpu_custom_call.1']
    #allocation7 [shape = 'u8[16384]{0}', space=vmem, size = 0x4000, scoped, tag = 'input window, operand 2, single buffered']
    #allocation8 [shape = 'u8[2048]{0}', space=vmem, size = 0x800, scoped, tag = 'input window, operand 3, single buffered']
    #allocation9 [shape = 's32[1]{0}', space=sflag, size = 0x4, scoped, tag = 'scoped memory for tpu_custom_call.1']
    #allocation10 [shape = 'u8[8192]{0}', space=vmem, size = 0x2000, scoped, tag = 'output window, operand 0']
    %9 = vsyncpa [#allocation3], 0
    %s10 = scalar_lea.sflag [#allocation3], 1
    %11 = vsyncpa %s10, 0
    %12 = vsyncpa [#allocation6], 0
    %s13 = scalar_lea.sflag [#allocation6], 1
    %14 = vsyncpa %s13, 0
    %15 = vsyncpa [#allocation9], 0
    %16 = vsyncpa [#allocation4], 0
    %s17 = scalar_lea.sflag [#allocation4], 1
    %18 = vsyncpa %s17, 0
    loop: start=0, step=1, limit=4
    $region2: #{tpu_custom_call.1} parent=1 // loop_pre_header
      _
    $region3: #{tpu_custom_call.1} parent=1 // loop_header
      %s20 = sphi 0, %s24
      %p21 = scmp.ge.s32.totalorder %s20, 4
      %s30 = sphi 0, %s32
      %s33 = sphi 0, %s30
      %s34 = sphi 0, %s33
      %s50 = sphi 0, %s34
      %s56 = sphi 0, %s58
      %s59 = sphi 0, %s56
      %s60 = sphi 0, %s59
      %s76 = sphi 0, %s60
      %s80 = sphi 0, %s80
      %s82 = sphi 0, %s80
      %s83 = sphi 0, %s82
      %s97 = sphi 0, %s83
      %s101 = sphi 0, %s101
      %s103 = sphi 0, %s101
      %s104 = sphi 0, %s103
      %s118 = sphi 0, %s104
      %s124 = sphi 0, %s126
      %s127 = sphi 0, %s124
      %s128 = sphi 0, %s127
      %s144 = sphi 0, %s128
    $region4: #{tpu_custom_call.1} parent=1 // loop_header_branch
      %23 = sbr.rel (%p21) target = $region8
    $region5: #{tpu_custom_call.1} parent=1 // loop_body
      %s25 = ssub.s32 %s20, 1
      %s26 = ssub.s32 %s20, 2
      %s27 = sadd.s32 %s20, 1
      %s28 = ssub.s32 %s20, %s27
      %p29 = scmp.eq.s32.totalorder %s28, 0
      %s31 = sadd.s32 %s30, 1
      %s32 = scalar_select %p29, %s30, %s31
      %p35 = pneg %p29
      %p36 = scmp.eq.s32.totalorder %s20, 1
      %p37 = por %p35, %p36
      %p38 = scmp.ne.s32.totalorder %s30, %s33
      %p39 = scmp.eq.s32.totalorder %s20, 0
      %p40 = por %p38, %p39
      %p41 = scmp.ne.s32.totalorder %s30, %s33
      %p42 = scmp.eq.s32.totalorder %s25, 1
      %p43 = por %p41, %p42
      %p44 = scmp.ne.s32.totalorder %s33, %s34
      %p45 = scmp.eq.s32.totalorder %s25, 0
      %p46 = por %p44, %p45
      %p47 = scmp.ne.s32.totalorder %s33, %s34
      %p48 = scmp.eq.s32.totalorder %s26, 1
      %p49 = por %p47, %p48
      %p51 = scmp.ne.s32.totalorder %s34, %s50
      %p52 = scmp.eq.s32.totalorder %s26, 0
      %p53 = por %p51, %p52
      %s54 = ssub.s32 %s20, %s27
      %p55 = scmp.eq.s32.totalorder %s54, 0
      %s57 = sadd.s32 %s56, 1
      %s58 = scalar_select %p55, %s56, %s57
      %p61 = pneg %p55
      %p62 = scmp.eq.s32.totalorder %s20, 1
      %p63 = por %p61, %p62
      %p64 = scmp.ne.s32.totalorder %s56, %s59
      %p65 = scmp.eq.s32.totalorder %s20, 0
      %p66 = por %p64, %p65
      %p67 = scmp.ne.s32.totalorder %s56, %s59
      %p68 = scmp.eq.s32.totalorder %s25, 1
      %p69 = por %p67, %p68
      %p70 = scmp.ne.s32.totalorder %s59, %s60
      %p71 = scmp.eq.s32.totalorder %s25, 0
      %p72 = por %p70, %p71
      %p73 = scmp.ne.s32.totalorder %s59, %s60
      %p74 = scmp.eq.s32.totalorder %s26, 1
      %p75 = por %p73, %p74
      %p77 = scmp.ne.s32.totalorder %s60, %s76
      %p78 = scmp.eq.s32.totalorder %s26, 0
      %p79 = por %p77, %p78
      %s81 = sadd.s32 %s80, 1
      %p84 = scmp.eq.s32.totalorder %s20, 1
      %p85 = scmp.ne.s32.totalorder %s80, %s82
      %p86 = scmp.eq.s32.totalorder %s20, 0
      %p87 = por %p85, %p86
      %p88 = scmp.ne.s32.totalorder %s80, %s82
      %p89 = scmp.eq.s32.totalorder %s25, 1
      %p90 = por %p88, %p89
      %p91 = scmp.ne.s32.totalorder %s82, %s83
      %p92 = scmp.eq.s32.totalorder %s25, 0
      %p93 = por %p91, %p92
      %p94 = scmp.ne.s32.totalorder %s82, %s83
      %p95 = scmp.eq.s32.totalorder %s26, 1
      %p96 = por %p94, %p95
      %p98 = scmp.ne.s32.totalorder %s83, %s97
      %p99 = scmp.eq.s32.totalorder %s26, 0
      %p100 = por %p98, %p99
      %s102 = sadd.s32 %s101, 1
      %p105 = scmp.eq.s32.totalorder %s20, 1
      %p106 = scmp.ne.s32.totalorder %s101, %s103
      %p107 = scmp.eq.s32.totalorder %s20, 0
      %p108 = por %p106, %p107
      %p109 = scmp.ne.s32.totalorder %s101, %s103
      %p110 = scmp.eq.s32.totalorder %s25, 1
      %p111 = por %p109, %p110
      %p112 = scmp.ne.s32.totalorder %s103, %s104
      %p113 = scmp.eq.s32.totalorder %s25, 0
      %p114 = por %p112, %p113
      %p115 = scmp.ne.s32.totalorder %s103, %s104
      %p116 = scmp.eq.s32.totalorder %s26, 1
      %p117 = por %p115, %p116
      %p119 = scmp.ne.s32.totalorder %s104, %s118
      %p120 = scmp.eq.s32.totalorder %s26, 0
      %p121 = por %p119, %p120
      %s122 = ssub.s32 %s20, %s27
      %p123 = scmp.eq.s32.totalorder %s122, 0
      %s125 = sadd.s32 %s124, 1
      %s126 = scalar_select %p123, %s124, %s125
      %p129 = pneg %p123
      %p130 = scmp.eq.s32.totalorder %s20, 1
      %p131 = por %p129, %p130
      %p132 = scmp.ne.s32.totalorder %s124, %s127
      %p133 = scmp.eq.s32.totalorder %s20, 0
      %p134 = por %p132, %p133
      %p135 = scmp.ne.s32.totalorder %s124, %s127
      %p136 = scmp.eq.s32.totalorder %s25, 1
      %p137 = por %p135, %p136
      %p138 = scmp.ne.s32.totalorder %s127, %s128
      %p139 = scmp.eq.s32.totalorder %s25, 0
      %p140 = por %p138, %p139
      %p141 = scmp.ne.s32.totalorder %s127, %s128
      %p142 = scmp.eq.s32.totalorder %s26, 1
      %p143 = por %p141, %p142
      %p145 = scmp.ne.s32.totalorder %s128, %s144
      %p146 = scmp.eq.s32.totalorder %s26, 0
      %p147 = por %p145, %p146
      %p148 = scmp.le.s32.totalorder 1, %s20
      %p149 = scmp.lt.s32.totalorder %s20, 3
      %p150 = pnand %p148, %p149
      %p151 = pneg %p150
      // Predicated region
      $region9: #{tpu_custom_call.1} parent=5 // pred_check
        _
      $region10: #{tpu_custom_call.1} parent=5 // pred_check_branch
        %153 = sbr.rel (%p150) target = $region12
      $region11: #{tpu_custom_call.1} parent=5 // pred_region
        %s154 = ssub.s32 %s20, 1
        // Predicated region
        $region13: #{tpu_custom_call.1} parent=11 // pred_check
          %p155 = pneg %p93
        $region14: #{tpu_custom_call.1} parent=11 // pred_check_branch
          %157 = sbr.rel (%p155) target = $region16
        $region15: #{tpu_custom_call.1} parent=11 // pred_region
          %159 = vsyncadd [#allocation6], 0
          %s160 = sshll.u32 %s2, 4
          %s161 = int_to_ptr.hbm [resolvable:$true] %s160
          %s162 = sshll.u32 [#allocation7], 4
          %s163 = int_to_ptr.vmem [resolvable:$true] %s162
          %168 = dma.hbm_to_vmem [thread:$0]  %s161, 512, %s163, [#allocation6], 128, 128, 8
        $region16: #{tpu_custom_call.1} parent=11 // pred_fallthru
          _
        // Predicated region
        $region17: #{tpu_custom_call.1} parent=11 // pred_check
          %p169 = pneg %p114
        $region18: #{tpu_custom_call.1} parent=11 // pred_check_branch
          %171 = sbr.rel (%p169) target = $region20
        $region19: #{tpu_custom_call.1} parent=11 // pred_region
          %173 = vsyncadd [#allocation9], 0
          %s175 = sshll.u32 %s3, 4
          %s176 = int_to_ptr.hbm [resolvable:$true] %s175
          %s177 = sshll.u32 [#allocation8], 4
          %s178 = int_to_ptr.vmem [resolvable:$true] %s177
          %180 = dma.hbm_to_vmem [thread:$0]  %s176, 64, %s178, [#allocation9]
        $region20: #{tpu_custom_call.1} parent=11 // pred_fallthru
          _
      $region12: #{tpu_custom_call.1} parent=5 // pred_fallthru
        _
      %p181 = scmp.lt.s32.totalorder %s20, 2
      // Predicated region
      $region21: #{tpu_custom_call.1} parent=5 // pred_check
        %p182 = pneg %p181
      $region22: #{tpu_custom_call.1} parent=5 // pred_check_branch
        %184 = sbr.rel (%p182) target = $region24
      $region23: #{tpu_custom_call.1} parent=5 // pred_region
        // Predicated region
        $region25: #{tpu_custom_call.1} parent=23 // pred_check
          %p185 = pneg %p40
        $region26: #{tpu_custom_call.1} parent=23 // pred_check_branch
          %187 = sbr.rel (%p185) target = $region28
        $region27: #{tpu_custom_call.1} parent=23 // pred_region
          %s188 = sand.u32 %s30, 1
          %s189 = scalar_lea.sflag [#allocation3], %s188
          %s190 = sand.u32 %s30, 1
          %s191 = smul.addr %s190, 8
          %s192 = scalar_lea.vmem [#allocation2], %s191
          %194 = vsyncadd %s189, 0
          %s195 = smul.addr %s20, 8
          %s196 = scalar_lea.hbm %s0, %s195
          %s198 = sshll.u32 %s196, 4
          %s199 = int_to_ptr.hbm [resolvable:$true] %s198
          %s200 = sshll.u32 %s192, 4
          %s201 = int_to_ptr.vmem [resolvable:$true] %s200
          %203 = dma.hbm_to_vmem [thread:$0]  %s199, 128, %s201, %s189
        $region28: #{tpu_custom_call.1} parent=23 // pred_fallthru
          _
        // Predicated region
        $region29: #{tpu_custom_call.1} parent=23 // pred_check
          %p204 = pneg %p66
        $region30: #{tpu_custom_call.1} parent=23 // pred_check_branch
          %206 = sbr.rel (%p204) target = $region32
        $region31: #{tpu_custom_call.1} parent=23 // pred_region
          %s207 = sand.u32 %s20, 1
          %s208 = scalar_lea.sflag [#allocation6], %s207
          %s209 = sand.u32 %s56, 1
          %s210 = smul.addr %s209, 8
          %s211 = scalar_lea.vmem [#allocation5], %s210
          %213 = vsyncadd %s208, 0
          %s214 = smul.addr %s20, 8
          %s215 = scalar_lea.hbm %s1, %s214
          %s217 = sshll.u32 %s215, 4
          %s218 = int_to_ptr.hbm [resolvable:$true] %s217
          %s219 = sshll.u32 %s211, 4
          %s220 = int_to_ptr.vmem [resolvable:$true] %s219
          %222 = dma.hbm_to_vmem [thread:$0]  %s218, 128, %s220, %s208
        $region32: #{tpu_custom_call.1} parent=23 // pred_fallthru
          _
      $region24: #{tpu_custom_call.1} parent=5 // pred_fallthru
        _
      %p223 = scmp.le.s32.totalorder 1, %s20
      %p224 = scmp.lt.s32.totalorder %s20, 3
      %p225 = pnand %p223, %p224
      %p226 = pneg %p225
      // Predicated region
      $region33: #{tpu_custom_call.1} parent=5 // pred_check
        _
      $region34: #{tpu_custom_call.1} parent=5 // pred_check_branch
        %228 = sbr.rel (%p225) target = $region36
      $region35: #{tpu_custom_call.1} parent=5 // pred_region
        %s229 = ssub.s32 %s20, 1
        %s230 = sand.u32 %s33, 1
        %s231 = scalar_lea.sflag [#allocation3], %s230
        %s232 = sand.u32 %s33, 1
        %s233 = smul.addr %s232, 8
        %s234 = scalar_lea.vmem [#allocation2], %s233
        // Predicated region
        $region37: #{tpu_custom_call.1} parent=35 // pred_check
          %p235 = pneg %p46
        $region38: #{tpu_custom_call.1} parent=35 // pred_check_branch
          %237 = sbr.rel (%p235) target = $region40
        $region39: #{tpu_custom_call.1} parent=35 // pred_region
          %239 = dma.done %s231, 128
        $region40: #{tpu_custom_call.1} parent=35 // pred_fallthru
          _
        %s240 = sand.u32 %s25, 1
        %s241 = scalar_lea.sflag [#allocation6], %s240
        %s242 = sand.u32 %s59, 1
        %s243 = smul.addr %s242, 8
        %s244 = scalar_lea.vmem [#allocation5], %s243
        // Predicated region
        $region41: #{tpu_custom_call.1} parent=35 // pred_check
          %p245 = pneg %p72
        $region42: #{tpu_custom_call.1} parent=35 // pred_check_branch
          %247 = sbr.rel (%p245) target = $region44
        $region43: #{tpu_custom_call.1} parent=35 // pred_region
          %249 = dma.done %s241, 128
        $region44: #{tpu_custom_call.1} parent=35 // pred_fallthru
          _
        // Predicated region
        $region45: #{tpu_custom_call.1} parent=35 // pred_check
          %p250 = pneg %p93
        $region46: #{tpu_custom_call.1} parent=35 // pred_check_branch
          %252 = sbr.rel (%p250) target = $region48
        $region47: #{tpu_custom_call.1} parent=35 // pred_region
          %254 = dma.done [#allocation6], 512
        $region48: #{tpu_custom_call.1} parent=35 // pred_fallthru
          _
        // Predicated region
        $region49: #{tpu_custom_call.1} parent=35 // pred_check
          %p255 = pneg %p114
        $region50: #{tpu_custom_call.1} parent=35 // pred_check_branch
          %257 = sbr.rel (%p255) target = $region52
        $region51: #{tpu_custom_call.1} parent=35 // pred_region
          %259 = dma.done [#allocation9], 64
        $region52: #{tpu_custom_call.1} parent=35 // pred_fallthru
          _
        %s260 = sand.u32 %s33, 1
        %s261 = scalar_lea.sflag [#allocation3], %s260
        %s262 = sand.u32 %s33, 1
        %s263 = smul.addr %s262, 8
        %s264 = scalar_lea.vmem [#allocation2], %s263
        %p265 = pneg %p46
        %p266 = pneg %p43
        %s267 = sand.u32 %s25, 1
        %s268 = scalar_lea.sflag [#allocation6], %s267
        %s269 = sand.u32 %s59, 1
        %s270 = smul.addr %s269, 8
        %s271 = scalar_lea.vmem [#allocation5], %s270
        %p272 = pneg %p72
        %p273 = pneg %p69
        %p274 = pneg %p93
        %p275 = pneg %p90
        %p276 = pneg %p114
        %p277 = pneg %p111
        %p278 = pneg %p140
        %p279 = pneg %p137
        %s280 = sand.u32 %s127, 1
        %s281 = scalar_lea.sflag [#allocation4], %s280
        %s282 = sand.u32 %s127, 1
        %s283 = smul.addr %s282, 8
        %s284 = scalar_lea.vmem [#allocation10], %s283
        %v285 = vld [vmem:[%s234] sm:$0xff]
        %v286 = vld [vmem:[#allocation7] sm:$0xff]
        %v287 = vld [vmem:[#allocation7 + $0x8] sm:$0xff]
        %v288 = vld [vmem:[#allocation7 + $0x10] sm:$0xff]
        %v289 = vld [vmem:[#allocation7 + $0x18] sm:$0xff]
        %v290 = vld [vmem:[#allocation8] sm:$0x1]
        %v291 = vld [vmem:[#allocation8 + $0x1] sm:$0x1]
        %v292 = vld [vmem:[#allocation8 + $0x2] sm:$0x1]
        %v293 = vperm.slane %v290, 0
        %vm294 = vcmask 261120
        %v296 = vsel %vm294, %v285, 0
        %298 = vmatpush.msra.mxu0 0.0
        %299 = vmatpush.msra.mxu0 0.0
        %300 = vmatpush.msra.mxu0 0.0
        %301 = vmatpush.msra.mxu0 0.0
        %302 = vmatpush.msra.mxu0 0.0
        %303 = vmatpush.msra.mxu0 0.0
        %304 = vmatpush.msra.mxu0 0.0
        %305 = vmatpush.msra.mxu0 0.0
        %306 = vmatpush.msra.mxu0 0.0
        %307 = vmatpush.msra.mxu0 0.0
        %308 = vmatpush.msra.mxu0 0.0
        %309 = vmatpush.msra.mxu0 0.0
        %310 = vmatpush.msra.mxu0 %v289
        %311 = vmatpush.msra.mxu0 %v288
        %312 = vmatpush.msra.mxu0 %v287
        %313 = vmatpush.msra.mxu0 %v286
        %314 = vmatmul.f32.gmra.mxu0 %v296
        %v315 = vpop.f32.mrf.mxu0
        %v316 = vadd.f32 %v293, %v315
        %317 = vdwg.mxu0
        %v318 = vld [vmem:[%s244] sm:$0xff]
        %v319 = vadd.f32 %v316, %v318
        %v320 = vsel %vm294, %v319, 0.0
        %321 = vadd.xlane.f32.xlu0 %v320
        %v322 = vpop.xlane.xlu0 %321
        %v323 = vmul.f32 %v322, 0.03125
        %v324 = vsub.f32 %v319, %v323
        %v325 = vmul.f32 %v324, %v324
        %v326 = vsel %vm294, %v325, 0.0
        %327 = vadd.xlane.f32.xlu0 %v326
        %v328 = vpop.xlane.xlu0 %327
        %v329 = vmul.f32 %v328, 0.03125
        %v330 = vadd.f32 %v329, 1e-12
        %v331 = vrsqrt.pop %v330
        %v332 = vmul.f32 %v331, %v330
        %v333 = vmul.f32 %v332, %v331
        %v334 = vmul.f32 0.5, %v333
        %v335 = vsub.f32 1.5, %v334
        %v336 = vmul.f32 %v331, %v335
        %vm337 = vweird.f32 %v330
        %vm338 = vweird.f32 %v331
        %vm339 = vmor %vm337, %vm338
        %v340 = vsel %vm339, %v331, %v336
        %v341 = vmul.f32 %v324, %v340
        %v342 = vperm.slane %v291, 0
        %v343 = vmul.f32 %v342, %v341
        %v344 = vperm.slane %v292, 0
        %v345 = vadd.f32 %v343, %v344
        %346 = vst.msk [vmem:[%s284] sm:$0xff] %vm294, %v345
        %s347 = sand.u32 %s127, 1
        %s348 = scalar_lea.sflag [#allocation4], %s347
        %s349 = sand.u32 %s127, 1
        %s350 = smul.addr %s349, 8
        %s351 = scalar_lea.vmem [#allocation10], %s350
        // Predicated region
        $region53: #{tpu_custom_call.1} parent=35 // pred_check
          %p352 = pneg %p137
        $region54: #{tpu_custom_call.1} parent=35 // pred_check_branch
          %354 = sbr.rel (%p352) target = $region56
        $region55: #{tpu_custom_call.1} parent=35 // pred_region
          %356 = vsyncadd %s348, 0
          %s357 = smul.addr %s25, 8
          %s358 = scalar_lea.hbm %s4, %s357
          %s360 = sshll.u32 %s351, 4
          %s361 = int_to_ptr.vmem [resolvable:$true] %s360
          %s362 = sshll.u32 %s358, 4
          %s363 = int_to_ptr.hbm [resolvable:$true] %s362
          %365 = dma.vmem_to_hbm [thread:$0]  %s361, 128, %s363, %s348
        $region56: #{tpu_custom_call.1} parent=35 // pred_fallthru
          _
      $region36: #{tpu_custom_call.1} parent=5 // pred_fallthru
        _
      %p366 = scmp.le.s32.totalorder 2, %s20
      // Predicated region
      $region57: #{tpu_custom_call.1} parent=5 // pred_check
        %p367 = pneg %p366
      $region58: #{tpu_custom_call.1} parent=5 // pred_check_branch
        %369 = sbr.rel (%p367) target = $region60
      $region59: #{tpu_custom_call.1} parent=5 // pred_region
        %s370 = ssub.s32 %s20, 2
        // Predicated region
        $region61: #{tpu_custom_call.1} parent=59 // pred_check
          %p371 = pneg %p143
        $region62: #{tpu_custom_call.1} parent=59 // pred_check_branch
          %373 = sbr.rel (%p371) target = $region64
        $region63: #{tpu_custom_call.1} parent=59 // pred_region
          %s374 = sand.u32 %s128, 1
          %s375 = scalar_lea.sflag [#allocation4], %s374
          %s376 = sand.u32 %s128, 1
          %s377 = smul.addr %s376, 8
          %s378 = scalar_lea.vmem [#allocation10], %s377
          %380 = dma.done %s375, 128
        $region64: #{tpu_custom_call.1} parent=59 // pred_fallthru
          _
      $region60: #{tpu_custom_call.1} parent=5 // pred_fallthru
        _
    $region6: #{tpu_custom_call.1} parent=1 // loop_footer
      %s24 = sadd.s32 1, %s20
    $region7: #{tpu_custom_call.1} parent=1 // loop_footer_branch
      %19 = sbr.rel target = $region3
    $region8: #{tpu_custom_call.1} parent=1 // loop_exit
      _
    %381 = vsyncpa [#allocation3], 1
    %s382 = scalar_lea.sflag [#allocation3], 1
    %383 = vsyncpa %s382, 1
    %384 = vsyncpa [#allocation6], 1
    %s385 = scalar_lea.sflag [#allocation6], 1
    %386 = vsyncpa %s385, 1
    %387 = vsyncpa [#allocation9], 1
    %388 = vsyncpa [#allocation4], 1
    %s389 = scalar_lea.sflag [#allocation4], 1
    %390 = vsyncpa %s389, 1

</llo_original>
